<compile_context>
chip_gen: v7x
topology: tpu7x:2x2x1
jax: 0.10.0
libtpu: 0.0.40
codegen_flags: <defaults>
</compile_context>

<pallas_src>
import functools

import jax
import jax.numpy as jnp
from jax.experimental import pallas as pl
from jax.experimental.pallas import tpu as pltpu


def _neg_binomial_kernel(h_ref, w_ref, b_ref, mu_ref, alpha_ref, *, n_out):
    # Fused linear: (bm, H) @ (H, 2*O) + bias row  (f32 accumulation on MXU).
    x = jnp.dot(h_ref[...], w_ref[...],
                preferred_element_type=jnp.float32) + b_ref[0:1, :]
    # Numerically stable softplus: max(x,0) + log1p(exp(-|x|)).
    # b_ref row 1 is the precomputed epsilon row (0 for mu cols, 1e-6 for alpha).
    sp = jnp.maximum(x, 0.0) + jnp.log1p(jnp.exp(-jnp.abs(x))) + b_ref[1:2, :]
    mu_ref[...] = sp[:, :n_out].astype(mu_ref.dtype)
    alpha_ref[...] = sp[:, n_out:2 * n_out].astype(alpha_ref.dtype)


def pack_negative_binomial_params(w_mu, b_mu, w_sigma, b_sigma, *,
                                  param_dtype=None):
    """One-time (init-time) packing of mu|sigma params.

    Returns:
      w_packed: (H, 2*O) in param_dtype (default: w_mu.dtype)
      b_packed: (2, 2*O) f32; row 0 = [b_mu | b_sigma], row 1 = [0 | 1e-6].
    """
    if param_dtype is None:
        param_dtype = w_mu.dtype
    _, O = w_mu.shape
    w_packed = jnp.concatenate(
        [w_mu.astype(param_dtype), w_sigma.astype(param_dtype)], axis=1)
    bias_row = jnp.concatenate(
        [b_mu.astype(jnp.float32), b_sigma.astype(jnp.float32)])
    eps_row = jnp.concatenate(
        [jnp.zeros((O,), jnp.float32), jnp.full((O,), 1e-6, jnp.float32)])
    b_packed = jnp.stack([bias_row, eps_row], axis=0)
    return w_packed, b_packed


def negative_binomial_forward(h, w_packed, b_packed, *, block_m=1024):
    """h: (B, H); w_packed: (H, 2*O); b_packed: (2, 2*O). Returns (mu, alpha)."""
    B, H = h.shape
    O2 = w_packed.shape[1]
    O = O2 // 2

    # Row tile: multiple of 8, capped at block_m; partial trailing block is
    # handled by Pallas (masked writeback), no explicit padding of h.
    bm = min(block_m, ((B + 7) // 8) * 8)
    bm = max(8, (bm // 8) * 8)
    grid = (pl.cdiv(B, bm),)

    cost = pl.CostEstimate(
        flops=2 * B * H * O2,
        transcendentals=2 * B * O2,               # exp + log1p per element
        bytes_accessed=(B * H * h.dtype.itemsize
                        + H * O2 * w_packed.dtype.itemsize
                        + 2 * O2 * 4
                        + 2 * B * O * 4),
    )

    mu, alpha = pl.pallas_call(
        functools.partial(_neg_binomial_kernel, n_out=O),
        out_shape=(jax.ShapeDtypeStruct((B, O), jnp.float32),
                   jax.ShapeDtypeStruct((B, O), jnp.float32)),
        grid_spec=pltpu.PrefetchScalarGridSpec(
            num_scalar_prefetch=0,
            grid=grid,
            in_specs=[
                pl.BlockSpec((bm, H), lambda i: (i, 0)),    # h row tile
                pl.BlockSpec((H, O2), lambda i: (0, 0)),    # packed weights (fetched once)
                pl.BlockSpec((2, O2), lambda i: (0, 0)),    # bias row + eps row
            ],
            out_specs=[
                pl.BlockSpec((bm, O), lambda i: (i, 0)),    # mu
                pl.BlockSpec((bm, O), lambda i: (i, 0)),    # alpha
            ],
        ),
        compiler_params=pltpu.CompilerParams(
            dimension_semantics=("parallel",)),
        cost_estimate=cost,
    )(h, w_packed, b_packed)
    return mu, alpha


def negative_binomial_ref(h, w_mu, b_mu, w_sigma, b_sigma):
    mu = jax.nn.softplus(h @ w_mu + b_mu)
    alpha = jax.nn.softplus(h @ w_sigma + b_sigma) + 1e-6
    return mu, alpha


if __name__ == "__main__":
    input_size = 32   # hidden h_{i,t} column size
    output_size = 16  # embedding size
    batch = 8

    key = jax.random.PRNGKey(0)
    k_h, k_wm, k_bm, k_ws, k_bs = jax.random.split(key, 5)

    # Deterministic synthetic parameters (nn.Linear shapes, stored transposed).
    bound = 1.0 / (input_size ** 0.5)
    h = jax.random.normal(k_h, (batch, input_size), dtype=jnp.float32)
    w_mu = jax.random.uniform(k_wm, (input_size, output_size),
                              minval=-bound, maxval=bound, dtype=jnp.float32)
    b_mu = jax.random.uniform(k_bm, (output_size,),
                              minval=-bound, maxval=bound, dtype=jnp.float32)
    w_sigma = jax.random.uniform(k_ws, (input_size, output_size),
                                 minval=-bound, maxval=bound, dtype=jnp.float32)
    b_sigma = jax.random.uniform(k_bs, (output_size,),
                                 minval=-bound, maxval=bound, dtype=jnp.float32)

    # Pack once (init-time), reuse across forward calls.
    w_packed, b_packed = pack_negative_binomial_params(
        w_mu, b_mu, w_sigma, b_sigma)

    # Small single-tile case (matches the PyTorch module call shape).
    mu, alpha = negative_binomial_forward(h, w_packed, b_packed)
    jax.block_until_ready((mu, alpha))
    mu_ref, alpha_ref = negative_binomial_ref(h, w_mu, b_mu, w_sigma, b_sigma)
    assert mu.shape == (batch, output_size) and alpha.shape == (batch, output_size)
    assert jnp.allclose(mu, mu_ref, atol=1e-5, rtol=1e-5)
    assert jnp.allclose(alpha, alpha_ref, atol=1e-5, rtol=1e-5)

    # Batched (B*T rows) case exercising the row grid + partial trailing block.
    big_rows = 1000
    h_big = jax.random.normal(jax.random.PRNGKey(1), (big_rows, input_size),
                              dtype=jnp.float32)
    mu_b, alpha_b = negative_binomial_forward(h_big, w_packed, b_packed,
                                              block_m=256)
    jax.block_until_ready((mu_b, alpha_b))
    mu_br, alpha_br = negative_binomial_ref(h_big, w_mu, b_mu, w_sigma, b_sigma)
    assert mu_b.shape == (big_rows, output_size)
    assert jnp.allclose(mu_b, mu_br, atol=1e-5, rtol=1e-5)
    assert jnp.allclose(alpha_b, alpha_br, atol=1e-5, rtol=1e-5)

    # bf16-I/O path (halves dominant HBM reads; accumulation stays f32,
    # outputs stay f32 so the 1e-6 epsilon survives).
    w_packed_bf, b_packed_bf = pack_negative_binomial_params(
        w_mu, b_mu, w_sigma, b_sigma, param_dtype=jnp.bfloat16)
    mu_lp, alpha_lp = negative_binomial_forward(
        h_big.astype(jnp.bfloat16), w_packed_bf, b_packed_bf, block_m=256)
    jax.block_until_ready((mu_lp, alpha_lp))
    assert jnp.allclose(mu_lp, mu_br, atol=2e-2, rtol=2e-2)
    assert jnp.allclose(alpha_lp, alpha_br, atol=2e-2, rtol=2e-2)

    print("KERNEL_OK")
</pallas_src>

<mosaic_0001>
module attributes {stable_mosaic.version = 11 : i64} {
  func.func @_neg_binomial_kernel(%arg0: i32, %arg1: memref<8x32xf32, #tpu.memory_space<vmem>>, %arg2: memref<32x32xf32, #tpu.memory_space<vmem>>, %arg3: memref<2x32xf32, #tpu.memory_space<vmem>>, %arg4: memref<8x16xf32, #tpu.memory_space<vmem>>, %arg5: memref<8x16xf32, #tpu.memory_space<vmem>>) attributes {dimension_semantics = [#tpu.dimension_semantics<parallel>], iteration_bounds = array<i64: 1>, scalar_prefetch = 0 : i64, scratch_operands = 0 : i64, tpu.core_type = #tpu.core_type<tc>, window_params = [{transform_indices = @transform_0, window_bounds = array<i64: 8, 32>}, {pipeline_mode = #tpu.pipeline_mode<synchronous>, transform_indices = @transform_1, window_bounds = array<i64: 32, 32>}, {pipeline_mode = #tpu.pipeline_mode<synchronous>, transform_indices = @transform_2, window_bounds = array<i64: 2, 32>}, {transform_indices = @transform_3, window_bounds = array<i64: 8, 16>}, {transform_indices = @transform_4, window_bounds = array<i64: 8, 16>}]} {
    %c0 = arith.constant 0 : index
    %c0_0 = arith.constant 0 : index
    %0 = vector.load %arg1[%c0, %c0_0] : memref<8x32xf32, #tpu.memory_space<vmem>>, vector<8x32xf32>
    %c0_1 = arith.constant 0 : index
    %c0_2 = arith.constant 0 : index
    %1 = vector.load %arg2[%c0_1, %c0_2] : memref<32x32xf32, #tpu.memory_space<vmem>>, vector<32x32xf32>
    %cst = arith.constant dense<0.000000e+00> : vector<8x32xf32>
    %2 = tpu.matmul %0, %1, %cst {dimension_numbers = #tpu.dot_dimension_numbers<[1], [0], [0], [1], [0, 0, 1, 1], [], []>} : vector<8x32xf32>, vector<32x32xf32>, vector<8x32xf32> -> vector<8x32xf32>
    %c0_3 = arith.constant 0 : index
    %c0_4 = arith.constant 0 : index
    %3 = vector.load %arg3[%c0_3, %c0_4] : memref<2x32xf32, #tpu.memory_space<vmem>>, vector<1x32xf32>
    %4 = vector.broadcast %3 : vector<1x32xf32> to vector<8x32xf32>
    %5 = arith.addf %2, %4 : vector<8x32xf32>
    %cst_5 = arith.constant 0.000000e+00 : f32
    %6 = vector.broadcast %cst_5 : f32 to vector<8x32xf32>
    %7 = arith.maximumf %5, %6 : vector<8x32xf32>
    %8 = math.absf %5 : vector<8x32xf32>
    %cst_6 = arith.constant 0.000000e+00 : f32
    %9 = vector.broadcast %cst_6 : f32 to vector<8x32xf32>
    %10 = arith.subf %9, %8 : vector<8x32xf32>
    %11 = math.exp %10 : vector<8x32xf32>
    %12 = math.log1p %11 : vector<8x32xf32>
    %13 = arith.addf %7, %12 : vector<8x32xf32>
    %c1 = arith.constant 1 : index
    %c0_7 = arith.constant 0 : index
    %14 = vector.load %arg3[%c1, %c0_7] : memref<2x32xf32, #tpu.memory_space<vmem>>, vector<1x32xf32>
    %15 = vector.broadcast %14 : vector<1x32xf32> to vector<8x32xf32>
    %16 = arith.addf %13, %15 : vector<8x32xf32>
    %17 = vector.extract_strided_slice %16 {offsets = [0, 0], sizes = [8, 16], strides = [1, 1]} : vector<8x32xf32> to vector<8x16xf32>
    %c0_8 = arith.constant 0 : index
    %c0_9 = arith.constant 0 : index
    %18 = vector.load %arg4[%c0_8, %c0_9] : memref<8x16xf32, #tpu.memory_space<vmem>>, vector<8x16xf32>
    tpu.vector_store %arg4[%c0_8, %c0_9], %17 {strides = array<i32>} : memref<8x16xf32, #tpu.memory_space<vmem>>, vector<8x16xf32>,
    %19 = vector.extract_strided_slice %16 {offsets = [0, 16], sizes = [8, 16], strides = [1, 1]} : vector<8x32xf32> to vector<8x16xf32>
    %c0_10 = arith.constant 0 : index
    %c0_11 = arith.constant 0 : index
    %20 = vector.load %arg5[%c0_10, %c0_11] : memref<8x16xf32, #tpu.memory_space<vmem>>, vector<8x16xf32>
    tpu.vector_store %arg5[%c0_10, %c0_11], %19 {strides = array<i32>} : memref<8x16xf32, #tpu.memory_space<vmem>>, vector<8x16xf32>,
    return
  }
  func.func @transform_0(%arg0: i32) -> (i32, i32) {
    %c0_i32 = arith.constant 0 : i32
    %c0_i32_0 = arith.constant 0 : i32
    return %arg0, %c0_i32 : i32, i32
  }
  func.func @transform_1(%arg0: i32) -> (i32, i32) {
    %c0_i32 = arith.constant 0 : i32
    %c0_i32_0 = arith.constant 0 : i32
    %c0_i32_1 = arith.constant 0 : i32
    return %c0_i32, %c0_i32_0 : i32, i32
  }
  func.func @transform_2(%arg0: i32) -> (i32, i32) {
    %c0_i32 = arith.constant 0 : i32
    %c0_i32_0 = arith.constant 0 : i32
    %c0_i32_1 = arith.constant 0 : i32
    return %c0_i32, %c0_i32_0 : i32, i32
  }
  func.func @transform_3(%arg0: i32) -> (i32, i32) {
    %c0_i32 = arith.constant 0 : i32
    %c0_i32_0 = arith.constant 0 : i32
    return %arg0, %c0_i32 : i32, i32
  }
  func.func @transform_4(%arg0: i32) -> (i32, i32) {
    %c0_i32 = arith.constant 0 : i32
    %c0_i32_0 = arith.constant 0 : i32
    return %arg0, %c0_i32 : i32, i32
  }
}

</mosaic_0001>

<llo_original>
// kernel: tpu_custom_call.1
$region0: #{tpu_custom_call.1}
  #allocation0 [shape = 'u32[]', space=smem, size = 0x4, offset = 0x4, fixed_abs, tag = 'smem constant byte address 0x4 - core index']
  #allocation1 [shape = 'u32[144,128]{1,0:T(1,128)}', space=vmem, size = 0x12000, scoped, tag = 'internal scratch']
  %s0 = inlined_call_operand.hbm [shape: f32[8,32], index: 0, kind: input, shape index: {}]
  %s1 = inlined_call_operand.hbm [shape: f32[32,32], index: 1, kind: input, shape index: {}]
  %s2 = inlined_call_operand.vmem [shape: f32[2,32], index: 2, kind: input, shape index: {}]
  %s3 = inlined_call_operand.hbm [shape: f32[8,16], index: 3, kind: output, shape index: {0}]
  %s4 = inlined_call_operand.hbm [shape: f32[8,16], index: 4, kind: output, shape index: {1}]
  %5 = xla_tuple %s3, %s4
  %s6 = sld [smem:[#allocation0]]
  $region38: #{tpu_custom_call.1} parent=0
    _
  %s8 = ssub.s32 1, %s6
  %s9 = scalar_select 0, %s8, %s6
  $region1: #{tpu_custom_call.1} parent=0
    #allocation2 [shape = 'u8[4096]{0}', space=vmem, size = 0x1000, scoped, tag = 'input window, operand 0, single buffered']
    #allocation3 [shape = 's32[1]{0}', space=sflag, size = 0x4, scoped, tag = 'scoped memory for tpu_custom_call.1']
    #allocation4 [shape = 's32[1]{0}', space=sflag, size = 0x4, scoped, tag = 'scoped memory for tpu_custom_call.1']
    #allocation5 [shape = 'u8[16384]{0}', space=vmem, size = 0x4000, scoped, tag = 'input window, operand 1, single buffered']
    #allocation6 [shape = 's32[1]{0}', space=sflag, size = 0x4, scoped, tag = 'scoped memory for tpu_custom_call.1']
    #allocation7 [shape = 'u8[4096]{0}', space=vmem, size = 0x1000, scoped, tag = 'output window, operand 0, single buffered']
    #allocation8 [shape = 'u8[4096]{0}', space=vmem, size = 0x1000, scoped, tag = 'output window, operand 1, single buffered']
    #allocation9 [shape = 's32[1]{0}', space=sflag, size = 0x4, scoped, tag = 'scoped memory for tpu_custom_call.1']
    %10 = vsyncpa [#allocation3], 0
    %11 = vsyncpa [#allocation6], 0
    %12 = vsyncpa [#allocation4], 0
    %13 = vsyncpa [#allocation9], 0
    // Predicated region
    $region2: #{tpu_custom_call.1} parent=1 // pred_check
      _
    $region3: #{tpu_custom_call.1} parent=1 // pred_check_branch
      %15 = sbr.rel (0) target = $region5
    $region4: #{tpu_custom_call.1} parent=1 // pred_region
      %s17 = ssub.s32 128, 128
      %18 = vsyncadd [#allocation3], %s17
      %s20 = sshll.u32 [#allocation2], 4
      %s21 = int_to_ptr.vmem [resolvable:$true] %s20
      %23 = dma.hbm_to_vmem [thread:$0]  %s0, 128, %s21, [#allocation3]
    $region5: #{tpu_custom_call.1} parent=1 // pred_fallthru
      _
    // Predicated region
    $region6: #{tpu_custom_call.1} parent=1 // pred_check
      _
    $region7: #{tpu_custom_call.1} parent=1 // pred_check_branch
      %25 = sbr.rel (0) target = $region9
    $region8: #{tpu_custom_call.1} parent=1 // pred_region
      %s27 = ssub.s32 512, 512
      %28 = vsyncadd [#allocation6], %s27
      %s29 = sshll.u32 [#allocation5], 4
      %s30 = int_to_ptr.vmem [resolvable:$true] %s29
      %35 = dma.hbm_to_vmem [thread:$0]  %s1, 512, %s30, [#allocation6], 128, 128, 8
    $region9: #{tpu_custom_call.1} parent=1 // pred_fallthru
      _
    // Predicated region
    $region10: #{tpu_custom_call.1} parent=1 // pred_check
      _
    $region11: #{tpu_custom_call.1} parent=1 // pred_check_branch
      %37 = sbr.rel (0) target = $region13
    $region12: #{tpu_custom_call.1} parent=1 // pred_region
      _
    $region13: #{tpu_custom_call.1} parent=1 // pred_fallthru
      _
    // Predicated region
    $region14: #{tpu_custom_call.1} parent=1 // pred_check
      _
    $region15: #{tpu_custom_call.1} parent=1 // pred_check_branch
      %39 = sbr.rel (0) target = $region17
    $region16: #{tpu_custom_call.1} parent=1 // pred_region
      %40 = dma.done [#allocation3], 128
    $region17: #{tpu_custom_call.1} parent=1 // pred_fallthru
      _
    // Predicated region
    $region18: #{tpu_custom_call.1} parent=1 // pred_check
      _
    $region19: #{tpu_custom_call.1} parent=1 // pred_check_branch
      %42 = sbr.rel (0) target = $region21
    $region20: #{tpu_custom_call.1} parent=1 // pred_region
      %43 = dma.done [#allocation6], 512
    $region21: #{tpu_custom_call.1} parent=1 // pred_fallthru
      _
    %v44 = vld [vmem:[#allocation2] sm:$0xff]
    %v45 = vld [vmem:[#allocation5] sm:$0xff]
    %v46 = vld [vmem:[#allocation5 + $0x8] sm:$0xff]
    %v47 = vld [vmem:[#allocation5 + $0x10] sm:$0xff]
    %v48 = vld [vmem:[#allocation5 + $0x18] sm:$0xff]
    %v49 = vld [vmem:[%s2] sm:$0x1]
    %v50 = vlaneseq
    %v51 = vshrl.u32 %v50, 7
    %v52 = vsub.s32 0, %v51
    %v53 = vrot.slane %v49, %v52
    %vm54 = vcmask 261120
    %v56 = vsel %vm54, %v44, 0
    %58 = vmatprep.subr.mxu0 0.0
    %59 = vmatpush1.msra.mxu0 %v45
    %60 = vmatprep.subr.mxu0 0.0
    %61 = vmatpush1.msra.mxu0 %v46
    %62 = vmatprep.subr.mxu0 0.0
    %63 = vmatpush1.msra.mxu0 %v47
    %64 = vmatprep.subr.mxu0 0.0
    %65 = vmatpush1.msra.mxu0 %v48
    %66 = vmatprep.subr.mxu0 0.0
    %67 = vmatpush1.msra.mxu0 0.0
    %68 = vmatprep.subr.mxu0 0.0
    %69 = vmatpush1.msra.mxu0 0.0
    %70 = vmatprep.subr.mxu0 0.0
    %71 = vmatpush1.msra.mxu0 0.0
    %72 = vmatprep.subr.mxu0 0.0
    %73 = vmatpush1.msra.mxu0 0.0
    %74 = vmatprep.subr.mxu0 0.0
    %75 = vmatpush1.msra.mxu0 0.0
    %76 = vmatprep.subr.mxu0 0.0
    %77 = vmatpush1.msra.mxu0 0.0
    %78 = vmatprep.subr.mxu0 0.0
    %79 = vmatpush1.msra.mxu0 0.0
    %80 = vmatprep.subr.mxu0 0.0
    %81 = vmatpush1.msra.mxu0 0.0
    %82 = vmatprep.subr.mxu0 0.0
    %83 = vmatpush1.msra.mxu0 0.0
    %84 = vmatprep.subr.mxu0 0.0
    %85 = vmatpush1.msra.mxu0 0.0
    %86 = vmatprep.subr.mxu0 0.0
    %87 = vmatpush1.msra.mxu0 0.0
    %88 = vmatprep.subr.mxu0 0.0
    %89 = vmatpush1.msra.mxu0 0.0
    %90 = vmatprep.subr.mxu0 0.0
    %91 = vmatpush1.msra.mxu0 0.0
    %92 = vmatprep.subr.mxu0 0.0
    %93 = vmatpush1.msra.mxu0 0.0
    %94 = vmatprep.subr.mxu0 0.0
    %95 = vmatpush1.msra.mxu0 0.0
    %96 = vmatprep.subr.mxu0 0.0
    %97 = vmatpush1.msra.mxu0 0.0
    %98 = vmatprep.subr.mxu0 0.0
    %99 = vmatpush1.msra.mxu0 0.0
    %100 = vmatprep.subr.mxu0 0.0
    %101 = vmatpush1.msra.mxu0 0.0
    %102 = vmatprep.subr.mxu0 0.0
    %103 = vmatpush1.msra.mxu0 0.0
    %104 = vmatprep.subr.mxu0 0.0
    %105 = vmatpush1.msra.mxu0 0.0
    %106 = vmatprep.subr.mxu0 0.0
    %107 = vmatpush1.msra.mxu0 0.0
    %108 = vmatprep.subr.mxu0 0.0
    %109 = vmatpush1.msra.mxu0 0.0
    %110 = vmatprep.subr.mxu0 0.0
    %111 = vmatpush1.msra.mxu0 0.0
    %112 = vmatprep.subr.mxu0 0.0
    %113 = vmatpush1.msra.mxu0 0.0
    %114 = vmatprep.subr.mxu0 0.0
    %115 = vmatpush1.msra.mxu0 0.0
    %116 = vmatprep.subr.mxu0 0.0
    %117 = vmatpush1.msra.mxu0 0.0
    %118 = vmatprep.subr.mxu0 0.0
    %119 = vmatpush1.msra.mxu0 0.0
    %120 = vmatprep.subr.mxu0 0.0
    %121 = vmatpush1.msra.mxu0 0.0
    %122 = vmatprep.mubr.f32.mxu0 0.0
    %123 = vmatmul.mubr.f32.gmra.mrb[0].mxu0 %v56
    %v124 = vpop.f32.mrb[0].mxu0
    %v125 = vadd.f32 %v53, %v124
    %v126 = vpop.f32.mrb[0].mxu0
    %127 = vdwg.mxu0
    %v128 = vmax.f32 %v125, 0.0
    %v129 = vand.u32 2147483647, %v125
    %v130 = vsub.f32 0.0, %v129
    %v131 = vmul.f32 %v130, 1.442695
    %v132 = vpow.pop %v131
    %v133 = vadd.f32 %v132, 1.0
    %v134 = vlog2.pop %v133
    %v135 = vmul.f32 %v134, 0.6931472
    %v136 = vmul.f32 -0.5, %v132
    %v137 = vadd.f32 %v136, 1.0
    %v138 = vmul.f32 %v137, %v132
    %v139 = vand.u32 2147483647, %v132
    %vm140 = vcmp.lt.f32.partialorder %v139, 0.0004427343
    %v141 = vsel %vm140, %v138, %v135
    %v142 = vadd.f32 %v128, %v141
    %v143 = vld [vmem:[%s2 + $0x1] sm:$0x1]
    %v144 = vlaneseq
    %v145 = vshrl.u32 %v144, 7
    %v146 = vsub.s32 0, %v145
    %v147 = vrot.slane %v143, %v146
    %v148 = vadd.f32 %v142, %v147
    %vm149 = vcmask 130048
    %150 = vst.msk [vmem:[#allocation7] sm:$0xff] %vm149, %v148
    %152 = vrot.lane.b32.xlu0 %v148, 112
    %v153 = vpop.permute.xlu0 %152
    %155 = vst.msk [vmem:[#allocation8] sm:$0xff] %vm149, %v153
    // Predicated region
    $region22: #{tpu_custom_call.1} parent=1 // pred_check
      _
    $region23: #{tpu_custom_call.1} parent=1 // pred_check_branch
      %157 = sbr.rel (0) target = $region25
    $region24: #{tpu_custom_call.1} parent=1 // pred_region
      %s159 = ssub.s32 128, 128
      %160 = vsyncadd [#allocation4], %s159
      %s162 = sshll.u32 [#allocation7], 4
      %s163 = int_to_ptr.vmem [resolvable:$true] %s162
      %165 = dma.vmem_to_hbm [thread:$0]  %s163, 128, %s3, [#allocation4]
    $region25: #{tpu_custom_call.1} parent=1 // pred_fallthru
      _
    // Predicated region
    $region26: #{tpu_custom_call.1} parent=1 // pred_check
      _
    $region27: #{tpu_custom_call.1} parent=1 // pred_check_branch
      %167 = sbr.rel (0) target = $region29
    $region28: #{tpu_custom_call.1} parent=1 // pred_region
      %s169 = ssub.s32 128, 128
      %170 = vsyncadd [#allocation9], %s169
      %s172 = sshll.u32 [#allocation8], 4
      %s173 = int_to_ptr.vmem [resolvable:$true] %s172
      %175 = dma.vmem_to_hbm [thread:$0]  %s173, 128, %s4, [#allocation9]
    $region29: #{tpu_custom_call.1} parent=1 // pred_fallthru
      _
    // Predicated region
    $region30: #{tpu_custom_call.1} parent=1 // pred_check
      _
    $region31: #{tpu_custom_call.1} parent=1 // pred_check_branch
      %177 = sbr.rel (0) target = $region33
    $region32: #{tpu_custom_call.1} parent=1 // pred_region
      %178 = dma.done [#allocation4], 128
    $region33: #{tpu_custom_call.1} parent=1 // pred_fallthru
      _
    // Predicated region
    $region34: #{tpu_custom_call.1} parent=1 // pred_check
      _
    $region35: #{tpu_custom_call.1} parent=1 // pred_check_branch
      %180 = sbr.rel (0) target = $region37
    $region36: #{tpu_custom_call.1} parent=1 // pred_region
      %181 = dma.done [#allocation9], 128
    $region37: #{tpu_custom_call.1} parent=1 // pred_fallthru
      _
    %182 = vsyncpa [#allocation3], 1
    %183 = vsyncpa [#allocation6], 1
    %184 = vsyncpa [#allocation4], 1
    %185 = vsyncpa [#allocation9], 1

</llo_original>
